<compile_context>
chip_gen: v7x
topology: tpu7x:2x2x1
jax: 0.10.0
libtpu: 0.0.40
codegen_flags: <defaults>
</compile_context>

<pallas_src>
import jax
import jax.numpy as jnp
from jax.experimental import pallas as pl
from jax.experimental.pallas import tpu as pltpu


# ------------------------------ Pallas kernel --------------------------------

def _vt_encoder_kernel(x_ref, w1_ref, b1_ref, w2_ref, b2_ref, w3_ref, b3_ref,
                       o_ref):
    # x_ref : (C, TM)    f32       w1_ref: (32, C)   f32
    # w2_ref: (64, 32)   bf16      w3_ref: (1, 64)   bf16
    # bK_ref: (CoutK, 1) f32       o_ref : (1, TM)   f32
    x = x_ref[...]                                                    # (C, TM)

    h = jnp.dot(w1_ref[...], x, preferred_element_type=jnp.float32)  # (32, TM)
    h = jnp.maximum(h + b1_ref[...], 0.0).astype(jnp.bfloat16)

    h = jnp.dot(w2_ref[...], h, preferred_element_type=jnp.float32)  # (64, TM)
    h = jnp.maximum(h + b2_ref[...], 0.0).astype(jnp.bfloat16)

    y = jnp.dot(w3_ref[...], h, preferred_element_type=jnp.float32)  # (1, TM)
    o_ref[...] = jnp.maximum(y + b3_ref[...], 0.0)


# -------------------------------- wrapper -------------------------------------

def vt_basic_encoder_forward(params, x_nchw, *, tile_m=8192):
    """Forward pass of VT_BasicEncoder.  x_nchw: (N, C, H, W) -> (N, 1, H, W)."""
    w1, b1 = params["conv1"]          # (32, Cin), (32,)
    w2, b2 = params["conv2"]          # (64, 32) , (64,)
    w3, b3 = params["conv3"]          # (1, 64)  , (1,)
    c1, c2, c3 = w1.shape[0], w2.shape[0], w3.shape[0]

    N, C, H, W = x_nchw.shape
    HW = H * W

    if HW <= tile_m:
        tm = HW                        # full-extent pixel block (always legal)
        n_m = 1
    else:
        tm = tile_m                    # lane-dense tile; must be multiple of 128
        assert tm % 128 == 0
        n_m = pl.cdiv(HW, tm)          # ragged last block over-reads; OOB output
                                       # columns are never written back.

    x3 = x_nchw.reshape(N, C, HW)      # free reshape of contiguous NCHW (no copy)

    w1f = w1.astype(jnp.float32)
    w2b = w2.astype(jnp.bfloat16)
    w3b = w3.astype(jnp.bfloat16)
    b1c = b1.reshape(c1, 1).astype(jnp.float32)
    b2c = b2.reshape(c2, 1).astype(jnp.float32)
    b3c = b3.reshape(c3, 1).astype(jnp.float32)

    out = pl.pallas_call(
        _vt_encoder_kernel,
        out_shape=jax.ShapeDtypeStruct((N, c3, HW), jnp.float32),
        grid=(N, n_m),
        in_specs=[
            pl.BlockSpec((None, C, tm), lambda n, m: (n, 0, m)),   # x tile
            pl.BlockSpec((c1, C), lambda n, m: (0, 0)),            # W1 (resident)
            pl.BlockSpec((c1, 1), lambda n, m: (0, 0)),            # b1
            pl.BlockSpec((c2, c1), lambda n, m: (0, 0)),           # W2
            pl.BlockSpec((c2, 1), lambda n, m: (0, 0)),            # b2
            pl.BlockSpec((c3, c2), lambda n, m: (0, 0)),           # W3
            pl.BlockSpec((c3, 1), lambda n, m: (0, 0)),            # b3
        ],
        out_specs=pl.BlockSpec((None, c3, tm), lambda n, m: (n, 0, m)),
        compiler_params=pltpu.CompilerParams(
            dimension_semantics=("parallel", "parallel")),
    )(x3, w1f, b1c, w2b, b2c, w3b, b3c)

    return out.reshape(N, c3, H, W)    # (N, 1, H, W)


# ------------------------- parameters (synthetic) ------------------------------

def _conv1x1_params(key, cin, cout):
    # PyTorch Conv2d(k=1) default init: U(-1/sqrt(fan_in), 1/sqrt(fan_in)).
    kw, kb = jax.random.split(key)
    bound = 1.0 / float(cin) ** 0.5
    w = jax.random.uniform(kw, (cout, cin), jnp.float32, -bound, bound)
    b = jax.random.uniform(kb, (cout,), jnp.float32, -bound, bound)
    return w, b


def init_params(key, num_channels):
    k1, k2, k3 = jax.random.split(key, 3)
    return {
        "conv1": _conv1x1_params(k1, num_channels, 32),
        "conv2": _conv1x1_params(k2, 32, 64),
        "conv3": _conv1x1_params(k3, 64, 1),
    }


# ------------------------------ pure-JAX reference ----------------------------

def reference_forward(params, x_nchw):
    h = x_nchw
    for name in ("conv1", "conv2", "conv3"):
        w, b = params[name]
        h = jnp.einsum("oc,nchw->nohw", w, h) + b[None, :, None, None]
        h = jnp.maximum(h, 0.0)
    return h


# ----------------------------------- main --------------------------------------

if __name__ == "__main__":
    key = jax.random.PRNGKey(0)
    k_x, k_p = jax.random.split(key)

    N, C, H, W = 2, 3, 16, 16          # module default is C=3; small spatial size
    params = init_params(k_p, C)
    x = jax.random.normal(k_x, (N, C, H, W), jnp.float32)

    fwd = jax.jit(vt_basic_encoder_forward)
    out = jax.block_until_ready(fwd(params, x))
    assert out.shape == (N, 1, H, W), out.shape

    ref = reference_forward(params, x)
    # Layer 1 is f32; only the 32-/64-channel intermediates are bf16 -> ~1e-2 err.
    assert jnp.allclose(out, ref, atol=2e-2, rtol=2e-2), (
        float(jnp.max(jnp.abs(out - ref))))

    print("KERNEL_OK")
</pallas_src>

<mosaic_0001>
module attributes {stable_mosaic.version = 11 : i64} {
  func.func @_vt_encoder_kernel(%arg0: i32, %arg1: i32, %arg2: memref<1x3x256xf32, #tpu.memory_space<vmem>>, %arg3: memref<32x3xf32, #tpu.memory_space<vmem>>, %arg4: memref<32x1xf32, #tpu.memory_space<vmem>>, %arg5: memref<64x32xbf16, #tpu.memory_space<vmem>>, %arg6: memref<64x1xf32, #tpu.memory_space<vmem>>, %arg7: memref<1x64xbf16, #tpu.memory_space<vmem>>, %arg8: memref<1x1xf32, #tpu.memory_space<vmem>>, %arg9: memref<1x1x256xf32, #tpu.memory_space<vmem>>) attributes {dimension_semantics = [#tpu.dimension_semantics<parallel>, #tpu.dimension_semantics<parallel>], iteration_bounds = array<i64: 2, 1>, scalar_prefetch = 0 : i64, scratch_operands = 0 : i64, tpu.core_type = #tpu.core_type<tc>, window_params = [{transform_indices = @transform_0, window_bounds = array<i64: 1, 3, 256>}, {pipeline_mode = #tpu.pipeline_mode<synchronous>, transform_indices = @transform_1, window_bounds = array<i64: 32, 3>}, {pipeline_mode = #tpu.pipeline_mode<synchronous>, transform_indices = @transform_2, window_bounds = array<i64: 32, 1>}, {pipeline_mode = #tpu.pipeline_mode<synchronous>, transform_indices = @transform_3, window_bounds = array<i64: 64, 32>}, {pipeline_mode = #tpu.pipeline_mode<synchronous>, transform_indices = @transform_4, window_bounds = array<i64: 64, 1>}, {pipeline_mode = #tpu.pipeline_mode<synchronous>, transform_indices = @transform_5, window_bounds = array<i64: 1, 64>}, {pipeline_mode = #tpu.pipeline_mode<synchronous>, transform_indices = @transform_6, window_bounds = array<i64: 1, 1>}, {transform_indices = @transform_7, window_bounds = array<i64: 1, 1, 256>}]} {
    %c0 = arith.constant 0 : index
    %c0_0 = arith.constant 0 : index
    %c0_1 = arith.constant 0 : index
    %0 = vector.load %arg2[%c0, %c0_0, %c0_1] : memref<1x3x256xf32, #tpu.memory_space<vmem>>, vector<1x3x256xf32>
    %1 = vector.shape_cast %0 : vector<1x3x256xf32> to vector<3x256xf32>
    %c0_2 = arith.constant 0 : index
    %c0_3 = arith.constant 0 : index
    %2 = vector.load %arg3[%c0_2, %c0_3] : memref<32x3xf32, #tpu.memory_space<vmem>>, vector<32x3xf32>
    %cst = arith.constant dense<0.000000e+00> : vector<32x256xf32>
    %3 = tpu.matmul %2, %1, %cst {dimension_numbers = #tpu.dot_dimension_numbers<[1], [0], [0], [1], [0, 0, 1, 1], [], []>} : vector<32x3xf32>, vector<3x256xf32>, vector<32x256xf32> -> vector<32x256xf32>
    %c0_4 = arith.constant 0 : index
    %c0_5 = arith.constant 0 : index
    %4 = vector.load %arg4[%c0_4, %c0_5] : memref<32x1xf32, #tpu.memory_space<vmem>>, vector<32x1xf32>
    %5 = vector.broadcast %4 : vector<32x1xf32> to vector<32x256xf32>
    %6 = arith.addf %3, %5 : vector<32x256xf32>
    %cst_6 = arith.constant 0.000000e+00 : f32
    %7 = vector.broadcast %cst_6 : f32 to vector<32x256xf32>
    %8 = arith.maximumf %6, %7 : vector<32x256xf32>
    %9 = arith.truncf %8 : vector<32x256xf32> to vector<32x256xbf16>
    %c0_7 = arith.constant 0 : index
    %c0_8 = arith.constant 0 : index
    %10 = vector.load %arg5[%c0_7, %c0_8] : memref<64x32xbf16, #tpu.memory_space<vmem>>, vector<64x32xbf16>
    %cst_9 = arith.constant dense<0.000000e+00> : vector<64x256xf32>
    %11 = tpu.matmul %10, %9, %cst_9 {dimension_numbers = #tpu.dot_dimension_numbers<[1], [0], [0], [1], [0, 0, 1, 1], [], []>} : vector<64x32xbf16>, vector<32x256xbf16>, vector<64x256xf32> -> vector<64x256xf32>
    %c0_10 = arith.constant 0 : index
    %c0_11 = arith.constant 0 : index
    %12 = vector.load %arg6[%c0_10, %c0_11] : memref<64x1xf32, #tpu.memory_space<vmem>>, vector<64x1xf32>
    %13 = vector.broadcast %12 : vector<64x1xf32> to vector<64x256xf32>
    %14 = arith.addf %11, %13 : vector<64x256xf32>
    %cst_12 = arith.constant 0.000000e+00 : f32
    %15 = vector.broadcast %cst_12 : f32 to vector<64x256xf32>
    %16 = arith.maximumf %14, %15 : vector<64x256xf32>
    %17 = arith.truncf %16 : vector<64x256xf32> to vector<64x256xbf16>
    %c0_13 = arith.constant 0 : index
    %c0_14 = arith.constant 0 : index
    %18 = vector.load %arg7[%c0_13, %c0_14] : memref<1x64xbf16, #tpu.memory_space<vmem>>, vector<1x64xbf16>
    %cst_15 = arith.constant dense<0.000000e+00> : vector<1x256xf32>
    %19 = tpu.matmul %18, %17, %cst_15 {dimension_numbers = #tpu.dot_dimension_numbers<[1], [0], [0], [1], [0, 0, 1, 1], [], []>} : vector<1x64xbf16>, vector<64x256xbf16>, vector<1x256xf32> -> vector<1x256xf32>
    %c0_16 = arith.constant 0 : index
    %c0_17 = arith.constant 0 : index
    %20 = vector.load %arg8[%c0_16, %c0_17] : memref<1x1xf32, #tpu.memory_space<vmem>>, vector<1x1xf32>
    %21 = vector.broadcast %20 : vector<1x1xf32> to vector<1x256xf32>
    %22 = arith.addf %19, %21 : vector<1x256xf32>
    %cst_18 = arith.constant 0.000000e+00 : f32
    %23 = vector.broadcast %cst_18 : f32 to vector<1x256xf32>
    %24 = arith.maximumf %22, %23 : vector<1x256xf32>
    %c0_19 = arith.constant 0 : index
    %c0_20 = arith.constant 0 : index
    %c0_21 = arith.constant 0 : index
    %25 = vector.load %arg9[%c0_19, %c0_20, %c0_21] : memref<1x1x256xf32, #tpu.memory_space<vmem>>, vector<1x1x256xf32>
    %26 = vector.shape_cast %25 : vector<1x1x256xf32> to vector<1x256xf32>
    %27 = vector.shape_cast %24 : vector<1x256xf32> to vector<1x1x256xf32>
    tpu.vector_store %arg9[%c0_19, %c0_20, %c0_21], %27 {strides = array<i32>} : memref<1x1x256xf32, #tpu.memory_space<vmem>>, vector<1x1x256xf32>,
    return
  }
  func.func @transform_0(%arg0: i32, %arg1: i32) -> (i32, i32, i32) {
    %c0_i32 = arith.constant 0 : i32
    %c0_i32_0 = arith.constant 0 : i32
    return %arg0, %c0_i32, %arg1 : i32, i32, i32
  }
  func.func @transform_1(%arg0: i32, %arg1: i32) -> (i32, i32) {
    %c0_i32 = arith.constant 0 : i32
    %c0_i32_0 = arith.constant 0 : i32
    %c0_i32_1 = arith.constant 0 : i32
    return %c0_i32, %c0_i32_0 : i32, i32
  }
  func.func @transform_2(%arg0: i32, %arg1: i32) -> (i32, i32) {
    %c0_i32 = arith.constant 0 : i32
    %c0_i32_0 = arith.constant 0 : i32
    %c0_i32_1 = arith.constant 0 : i32
    return %c0_i32, %c0_i32_0 : i32, i32
  }
  func.func @transform_3(%arg0: i32, %arg1: i32) -> (i32, i32) {
    %c0_i32 = arith.constant 0 : i32
    %c0_i32_0 = arith.constant 0 : i32
    %c0_i32_1 = arith.constant 0 : i32
    return %c0_i32, %c0_i32_0 : i32, i32
  }
  func.func @transform_4(%arg0: i32, %arg1: i32) -> (i32, i32) {
    %c0_i32 = arith.constant 0 : i32
    %c0_i32_0 = arith.constant 0 : i32
    %c0_i32_1 = arith.constant 0 : i32
    return %c0_i32, %c0_i32_0 : i32, i32
  }
  func.func @transform_5(%arg0: i32, %arg1: i32) -> (i32, i32) {
    %c0_i32 = arith.constant 0 : i32
    %c0_i32_0 = arith.constant 0 : i32
    %c0_i32_1 = arith.constant 0 : i32
    return %c0_i32, %c0_i32_0 : i32, i32
  }
  func.func @transform_6(%arg0: i32, %arg1: i32) -> (i32, i32) {
    %c0_i32 = arith.constant 0 : i32
    %c0_i32_0 = arith.constant 0 : i32
    %c0_i32_1 = arith.constant 0 : i32
    return %c0_i32, %c0_i32_0 : i32, i32
  }
  func.func @transform_7(%arg0: i32, %arg1: i32) -> (i32, i32, i32) {
    %c0_i32 = arith.constant 0 : i32
    %c0_i32_0 = arith.constant 0 : i32
    return %arg0, %c0_i32, %arg1 : i32, i32, i32
  }
}

</mosaic_0001>

<llo_original>
// kernel: vt_basic_encoder_forward.1
$region0: #{vt_basic_encoder_forward.1}
  #allocation0 [shape = 'u32[]', space=smem, size = 0x4, offset = 0x4, fixed_abs, tag = 'smem constant byte address 0x4 - core index']
  #allocation1 [shape = 'u32[144,128]{1,0:T(1,128)}', space=vmem, size = 0x12000, scoped, tag = 'internal scratch']
  #allocation2 [shape = 'f32[1,1]{1,0:T(1,128)S(1)}', space=vmem, size = 0x200, scoped, tag = 'scoped memory for vt_basic_encoder_forward.1']
  %s0 = inlined_call_operand.vmem [shape: f32[2,3,256], index: 0, kind: input, shape index: {}]
  %s1 = inlined_call_operand.vmem [shape: f32[32,3], index: 1, kind: input, shape index: {}]
  %s2 = inlined_call_operand.vmem [shape: f32[32,1], index: 2, kind: input, shape index: {}]
  %s3 = inlined_call_operand.vmem [shape: bf16[64,32], index: 3, kind: input, shape index: {}]
  %s4 = inlined_call_operand.vmem [shape: f32[64,1], index: 4, kind: input, shape index: {}]
  %s5 = inlined_call_operand.vmem [shape: bf16[1,64], index: 5, kind: input, shape index: {}]
  %s6 = inlined_call_operand.<no memory space> [shape: f32[1,1], index: 6, kind: input, shape index: {}]
  %s7 = inlined_call_operand.vmem [shape: f32[2,1,256], index: 7, kind: output, shape index: {}]
  %s8 = sld [smem:[#allocation0]]
  $region61: #{vt_basic_encoder_forward.1} parent=0
    _
  %s10 = ssub.s32 1, %s8
  %s11 = scalar_select 0, %s10, %s8
  %v12 = vstv %s6
  %13 = vst [vmem:[#allocation2] sm:$0x1] %v12
  loop: start=0, step=1, limit=4
  $region2: #{vt_basic_encoder_forward.1} parent=0 // loop_pre_header
    _
  $region3: #{vt_basic_encoder_forward.1} parent=0 // loop_header
    %s15 = sphi 0, %s19
    %p16 = scmp.ge.s32.totalorder %s15, 4
    %s22 = sphi 0, %s34
    %s23 = sphi 0, %s30
    %s24 = sphi 0, %s22
    %s25 = sphi 0, %s23
    %s26 = sphi 0, %s24
    %s27 = sphi 0, %s25
    %s39 = sphi 0, %s41
    %s42 = sphi 0, %s39
    %s43 = sphi 0, %s42
    %s59 = sphi 0, %s43
    %s63 = sphi 0, %s63
    %s65 = sphi 0, %s63
    %s66 = sphi 0, %s65
    %s80 = sphi 0, %s66
    %s84 = sphi 0, %s84
    %s86 = sphi 0, %s84
    %s87 = sphi 0, %s86
    %s101 = sphi 0, %s87
    %s105 = sphi 0, %s105
    %s107 = sphi 0, %s105
    %s108 = sphi 0, %s107
    %s122 = sphi 0, %s108
    %s126 = sphi 0, %s126
    %s128 = sphi 0, %s126
    %s129 = sphi 0, %s128
    %s143 = sphi 0, %s129
    %s147 = sphi 0, %s147
    %s149 = sphi 0, %s147
    %s150 = sphi 0, %s149
    %s164 = sphi 0, %s150
    %s168 = sphi 0, %s168
    %s170 = sphi 0, %s168
    %s171 = sphi 0, %s170
    %s185 = sphi 0, %s171
    %s193 = sphi 0, %s195
    %s196 = sphi 0, %s193
    %s197 = sphi 0, %s196
    %s213 = sphi 0, %s197
  $region4: #{vt_basic_encoder_forward.1} parent=0 // loop_header_branch
    %18 = sbr.rel (%p16) target = $region8
  $region5: #{vt_basic_encoder_forward.1} parent=0 // loop_body
    %s20 = ssub.s32 %s15, 1
    %s21 = ssub.s32 %s15, 2
    %s28 = sadd.s32 1, %s23
    %p29 = scmp.ge.s32.totalorder %s28, 1
    %s30 = scalar_select %p29, 0, %s28
    %s31 = sadd.s32 1, %s22
    %s32 = scalar_select %p29, %s31, %s22
    %p33 = scmp.ge.s32.totalorder %s32, 2
    %s34 = scalar_select %p33, 0, %s32
    %s35 = ssub.s32 %s22, %s34
    %s36 = ssub.s32 %s23, %s30
    %s37 = sor.u32 %s35, %s36
    %p38 = scmp.eq.s32.totalorder %s37, 0
    %s40 = sadd.s32 %s39, 1
    %s41 = scalar_select %p38, %s39, %s40
    %p44 = pneg %p38
    %p45 = scmp.eq.s32.totalorder %s15, 1
    %p46 = por %p44, %p45
    %p47 = scmp.ne.s32.totalorder %s39, %s42
    %p48 = scmp.eq.s32.totalorder %s15, 0
    %p49 = por %p47, %p48
    %p50 = scmp.ne.s32.totalorder %s39, %s42
    %p51 = scmp.eq.s32.totalorder %s20, 1
    %p52 = por %p50, %p51
    %p53 = scmp.ne.s32.totalorder %s42, %s43
    %p54 = scmp.eq.s32.totalorder %s20, 0
    %p55 = por %p53, %p54
    %p56 = scmp.ne.s32.totalorder %s42, %s43
    %p57 = scmp.eq.s32.totalorder %s21, 1
    %p58 = por %p56, %p57
    %p60 = scmp.ne.s32.totalorder %s43, %s59
    %p61 = scmp.eq.s32.totalorder %s21, 0
    %p62 = por %p60, %p61
    %s64 = sadd.s32 %s63, 1
    %p67 = scmp.eq.s32.totalorder %s15, 1
    %p68 = scmp.ne.s32.totalorder %s63, %s65
    %p69 = scmp.eq.s32.totalorder %s15, 0
    %p70 = por %p68, %p69
    %p71 = scmp.ne.s32.totalorder %s63, %s65
    %p72 = scmp.eq.s32.totalorder %s20, 1
    %p73 = por %p71, %p72
    %p74 = scmp.ne.s32.totalorder %s65, %s66
    %p75 = scmp.eq.s32.totalorder %s20, 0
    %p76 = por %p74, %p75
    %p77 = scmp.ne.s32.totalorder %s65, %s66
    %p78 = scmp.eq.s32.totalorder %s21, 1
    %p79 = por %p77, %p78
    %p81 = scmp.ne.s32.totalorder %s66, %s80
    %p82 = scmp.eq.s32.totalorder %s21, 0
    %p83 = por %p81, %p82
    %s85 = sadd.s32 %s84, 1
    %p88 = scmp.eq.s32.totalorder %s15, 1
    %p89 = scmp.ne.s32.totalorder %s84, %s86
    %p90 = scmp.eq.s32.totalorder %s15, 0
    %p91 = por %p89, %p90
    %p92 = scmp.ne.s32.totalorder %s84, %s86
    %p93 = scmp.eq.s32.totalorder %s20, 1
    %p94 = por %p92, %p93
    %p95 = scmp.ne.s32.totalorder %s86, %s87
    %p96 = scmp.eq.s32.totalorder %s20, 0
    %p97 = por %p95, %p96
    %p98 = scmp.ne.s32.totalorder %s86, %s87
    %p99 = scmp.eq.s32.totalorder %s21, 1
    %p100 = por %p98, %p99
    %p102 = scmp.ne.s32.totalorder %s87, %s101
    %p103 = scmp.eq.s32.totalorder %s21, 0
    %p104 = por %p102, %p103
    %s106 = sadd.s32 %s105, 1
    %p109 = scmp.eq.s32.totalorder %s15, 1
    %p110 = scmp.ne.s32.totalorder %s105, %s107
    %p111 = scmp.eq.s32.totalorder %s15, 0
    %p112 = por %p110, %p111
    %p113 = scmp.ne.s32.totalorder %s105, %s107
    %p114 = scmp.eq.s32.totalorder %s20, 1
    %p115 = por %p113, %p114
    %p116 = scmp.ne.s32.totalorder %s107, %s108
    %p117 = scmp.eq.s32.totalorder %s20, 0
    %p118 = por %p116, %p117
    %p119 = scmp.ne.s32.totalorder %s107, %s108
    %p120 = scmp.eq.s32.totalorder %s21, 1
    %p121 = por %p119, %p120
    %p123 = scmp.ne.s32.totalorder %s108, %s122
    %p124 = scmp.eq.s32.totalorder %s21, 0
    %p125 = por %p123, %p124
    %s127 = sadd.s32 %s126, 1
    %p130 = scmp.eq.s32.totalorder %s15, 1
    %p131 = scmp.ne.s32.totalorder %s126, %s128
    %p132 = scmp.eq.s32.totalorder %s15, 0
    %p133 = por %p131, %p132
    %p134 = scmp.ne.s32.totalorder %s126, %s128
    %p135 = scmp.eq.s32.totalorder %s20, 1
    %p136 = por %p134, %p135
    %p137 = scmp.ne.s32.totalorder %s128, %s129
    %p138 = scmp.eq.s32.totalorder %s20, 0
    %p139 = por %p137, %p138
    %p140 = scmp.ne.s32.totalorder %s128, %s129
    %p141 = scmp.eq.s32.totalorder %s21, 1
    %p142 = por %p140, %p141
    %p144 = scmp.ne.s32.totalorder %s129, %s143
    %p145 = scmp.eq.s32.totalorder %s21, 0
    %p146 = por %p144, %p145
    %s148 = sadd.s32 %s147, 1
    %p151 = scmp.eq.s32.totalorder %s15, 1
    %p152 = scmp.ne.s32.totalorder %s147, %s149
    %p153 = scmp.eq.s32.totalorder %s15, 0
    %p154 = por %p152, %p153
    %p155 = scmp.ne.s32.totalorder %s147, %s149
    %p156 = scmp.eq.s32.totalorder %s20, 1
    %p157 = por %p155, %p156
    %p158 = scmp.ne.s32.totalorder %s149, %s150
    %p159 = scmp.eq.s32.totalorder %s20, 0
    %p160 = por %p158, %p159
    %p161 = scmp.ne.s32.totalorder %s149, %s150
    %p162 = scmp.eq.s32.totalorder %s21, 1
    %p163 = por %p161, %p162
    %p165 = scmp.ne.s32.totalorder %s150, %s164
    %p166 = scmp.eq.s32.totalorder %s21, 0
    %p167 = por %p165, %p166
    %s169 = sadd.s32 %s168, 1
    %p172 = scmp.eq.s32.totalorder %s15, 1
    %p173 = scmp.ne.s32.totalorder %s168, %s170
    %p174 = scmp.eq.s32.totalorder %s15, 0
    %p175 = por %p173, %p174
    %p176 = scmp.ne.s32.totalorder %s168, %s170
    %p177 = scmp.eq.s32.totalorder %s20, 1
    %p178 = por %p176, %p177
    %p179 = scmp.ne.s32.totalorder %s170, %s171
    %p180 = scmp.eq.s32.totalorder %s20, 0
    %p181 = por %p179, %p180
    %p182 = scmp.ne.s32.totalorder %s170, %s171
    %p183 = scmp.eq.s32.totalorder %s21, 1
    %p184 = por %p182, %p183
    %p186 = scmp.ne.s32.totalorder %s171, %s185
    %p187 = scmp.eq.s32.totalorder %s21, 0
    %p188 = por %p186, %p187
    %s189 = ssub.s32 %s22, %s34
    %s190 = ssub.s32 %s23, %s30
    %s191 = sor.u32 %s189, %s190
    %p192 = scmp.eq.s32.totalorder %s191, 0
    %s194 = sadd.s32 %s193, 1
    %s195 = scalar_select %p192, %s193, %s194
    %p198 = pneg %p192
    %p199 = scmp.eq.s32.totalorder %s15, 1
    %p200 = por %p198, %p199
    %p201 = scmp.ne.s32.totalorder %s193, %s196
    %p202 = scmp.eq.s32.totalorder %s15, 0
    %p203 = por %p201, %p202
    %p204 = scmp.ne.s32.totalorder %s193, %s196
    %p205 = scmp.eq.s32.totalorder %s20, 1
    %p206 = por %p204, %p205
    %p207 = scmp.ne.s32.totalorder %s196, %s197
    %p208 = scmp.eq.s32.totalorder %s20, 0
    %p209 = por %p207, %p208
    %p210 = scmp.ne.s32.totalorder %s196, %s197
    %p211 = scmp.eq.s32.totalorder %s21, 1
    %p212 = por %p210, %p211
    %p214 = scmp.ne.s32.totalorder %s197, %s213
    %p215 = scmp.eq.s32.totalorder %s21, 0
    %p216 = por %p214, %p215
    %p217 = scmp.le.s32.totalorder 1, %s15
    %p218 = scmp.lt.s32.totalorder %s15, 3
    %p219 = pnand %p217, %p218
    %p220 = pneg %p219
    // Predicated region
    $region9: #{vt_basic_encoder_forward.1} parent=5 // pred_check
      _
    $region10: #{vt_basic_encoder_forward.1} parent=5 // pred_check_branch
      %222 = sbr.rel (%p219) target = $region12
    $region11: #{vt_basic_encoder_forward.1} parent=5 // pred_region
      %s223 = ssub.s32 %s15, 1
      // Predicated region
      $region13: #{vt_basic_encoder_forward.1} parent=11 // pred_check
        %p224 = pneg %p76
      $region14: #{vt_basic_encoder_forward.1} parent=11 // pred_check_branch
        %226 = sbr.rel (%p224) target = $region16
      $region15: #{vt_basic_encoder_forward.1} parent=11 // pred_region
        _
      $region16: #{vt_basic_encoder_forward.1} parent=11 // pred_fallthru
        _
      // Predicated region
      $region17: #{vt_basic_encoder_forward.1} parent=11 // pred_check
        %p227 = pneg %p97
      $region18: #{vt_basic_encoder_forward.1} parent=11 // pred_check_branch
        %229 = sbr.rel (%p227) target = $region20
      $region19: #{vt_basic_encoder_forward.1} parent=11 // pred_region
        _
      $region20: #{vt_basic_encoder_forward.1} parent=11 // pred_fallthru
        _
      // Predicated region
      $region21: #{vt_basic_encoder_forward.1} parent=11 // pred_check
        %p230 = pneg %p118
      $region22: #{vt_basic_encoder_forward.1} parent=11 // pred_check_branch
        %232 = sbr.rel (%p230) target = $region24
      $region23: #{vt_basic_encoder_forward.1} parent=11 // pred_region
        _
      $region24: #{vt_basic_encoder_forward.1} parent=11 // pred_fallthru
        _
      // Predicated region
      $region25: #{vt_basic_encoder_forward.1} parent=11 // pred_check
        %p233 = pneg %p139
      $region26: #{vt_basic_encoder_forward.1} parent=11 // pred_check_branch
        %235 = sbr.rel (%p233) target = $region28
      $region27: #{vt_basic_encoder_forward.1} parent=11 // pred_region
        _
      $region28: #{vt_basic_encoder_forward.1} parent=11 // pred_fallthru
        _
      // Predicated region
      $region29: #{vt_basic_encoder_forward.1} parent=11 // pred_check
        %p236 = pneg %p160
      $region30: #{vt_basic_encoder_forward.1} parent=11 // pred_check_branch
        %238 = sbr.rel (%p236) target = $region32
      $region31: #{vt_basic_encoder_forward.1} parent=11 // pred_region
        _
      $region32: #{vt_basic_encoder_forward.1} parent=11 // pred_fallthru
        _
      // Predicated region
      $region33: #{vt_basic_encoder_forward.1} parent=11 // pred_check
        %p239 = pneg %p181
      $region34: #{vt_basic_encoder_forward.1} parent=11 // pred_check_branch
        %241 = sbr.rel (%p239) target = $region36
      $region35: #{vt_basic_encoder_forward.1} parent=11 // pred_region
        _
      $region36: #{vt_basic_encoder_forward.1} parent=11 // pred_fallthru
        _
    $region12: #{vt_basic_encoder_forward.1} parent=5 // pred_fallthru
      _
    %p242 = scmp.lt.s32.totalorder %s15, 2
    // Predicated region
    $region37: #{vt_basic_encoder_forward.1} parent=5 // pred_check
      %p243 = pneg %p242
    $region38: #{vt_basic_encoder_forward.1} parent=5 // pred_check_branch
      %245 = sbr.rel (%p243) target = $region40
    $region39: #{vt_basic_encoder_forward.1} parent=5 // pred_region
      // Predicated region
      $region41: #{vt_basic_encoder_forward.1} parent=39 // pred_check
        %p246 = pneg %p49
      $region42: #{vt_basic_encoder_forward.1} parent=39 // pred_check_branch
        %248 = sbr.rel (%p246) target = $region44
      $region43: #{vt_basic_encoder_forward.1} parent=39 // pred_region
        %s249 = smul.u32 2, %s23
        %p250 = scmp.lt.s32.totalorder %s22, 1
        %s251 = scalar_select %p250, %s22, 1
        %p252 = scmp.lt.s32.totalorder %s249, 1
        %s253 = scalar_select %p252, %s249, 1
        %s254 = smul.addr %s251, 2
        %s255 = sadd.s32 %s253, %s254
        %s256 = smul.addr %s255, 4
        %s257 = scalar_lea.vmem %s0, %s256
        %s258 = smul.u32 2, %s23
      $region44: #{vt_basic_encoder_forward.1} parent=39 // pred_fallthru
        _
    $region40: #{vt_basic_encoder_forward.1} parent=5 // pred_fallthru
      _
    %p259 = scmp.le.s32.totalorder 1, %s15
    %p260 = scmp.lt.s32.totalorder %s15, 3
    %p261 = pnand %p259, %p260
    %p262 = pneg %p261
    // Predicated region
    $region45: #{vt_basic_encoder_forward.1} parent=5 // pred_check
      _
    $region46: #{vt_basic_encoder_forward.1} parent=5 // pred_check_branch
      %264 = sbr.rel (%p261) target = $region48
    $region47: #{vt_basic_encoder_forward.1} parent=5 // pred_region
      %s265 = ssub.s32 %s15, 1
      %s266 = smul.u32 2, %s25
      %p267 = scmp.lt.s32.totalorder %s24, 1
      %s268 = scalar_select %p267, %s24, 1
      %p269 = scmp.lt.s32.totalorder %s266, 1
      %s270 = scalar_select %p269, %s266, 1
      %s271 = smul.addr %s268, 2
      %s272 = sadd.s32 %s270, %s271
      %s273 = smul.addr %s272, 4
      %s274 = scalar_lea.vmem %s0, %s273
      %p275 = pneg %p55
      %p276 = pneg %p52
      %p277 = pneg %p76
      %p278 = pneg %p73
      %p279 = pneg %p97
      %p280 = pneg %p94
      %p281 = pneg %p118
      %p282 = pneg %p115
      %p283 = pneg %p139
      %p284 = pneg %p136
      %p285 = pneg %p160
      %p286 = pneg %p157
      %p287 = pneg %p181
      %p288 = pneg %p178
      %p289 = pneg %p209
      %p290 = pneg %p206
      %s291 = smul.u32 2, %s25
      %p292 = scmp.lt.s32.totalorder %s24, 1
      %s293 = scalar_select %p292, %s24, 1
      %p294 = scmp.lt.s32.totalorder %s291, 1
      %s295 = scalar_select %p294, %s291, 1
      %s296 = smul.addr %s293, 2
      %s297 = sadd.s32 %s295, %s296
      %s298 = scalar_lea.vmem %s7, %s297
      %s299 = smul.u32 2, %s25
      %p300 = scmp.lt.s32.totalorder %s24, 1
      %s301 = scalar_select %p300, %s24, 1
      %p302 = scmp.lt.s32.totalorder %s299, 1
      %s303 = scalar_select %p302, %s299, 1
      %s304 = smul.addr %s301, 2
      %s305 = sadd.s32 %s303, %s304
      %s306 = smul.addr %s305, 4
      %s307 = scalar_lea.vmem %s0, %s306
      %s308 = smul.u32 2, %s25
      %s309 = smul.u32 2, %s25
      %p310 = scmp.lt.s32.totalorder %s24, 1
      %s311 = scalar_select %p310, %s24, 1
      %p312 = scmp.lt.s32.totalorder %s309, 1
      %s313 = scalar_select %p312, %s309, 1
      %s314 = smul.addr %s311, 2
      %s315 = sadd.s32 %s313, %s314
      %s316 = scalar_lea.vmem %s7, %s315
      %s317 = smul.u32 2, %s25
      %v319 = vld [vmem:[%s307] sm:$0x77]
      %v320 = vld [vmem:[%s1] sm:$0xff]
      %v321 = vld [vmem:[%s1 + $0x8] sm:$0xff]
      %v322 = vld [vmem:[%s1 + $0x10] sm:$0xff]
      %v323 = vld [vmem:[%s1 + $0x18] sm:$0xff]
      %v324 = vld [vmem:[%s2] sm:$0xff]
      %v325 = vld [vmem:[%s2 + $0x8] sm:$0xff]
      %v326 = vld [vmem:[%s2 + $0x10] sm:$0xff]
      %v327 = vld [vmem:[%s2 + $0x18] sm:$0xff]
      %329 = vset.pattern.permute.xlu0 0
      %330 = vperm.xlu0 %329, %v324
      %v331 = vpop.permute.xlu0 %330
      %334 = vset.pattern.permute.xlu0 0
      %335 = vperm.xlu0 %334, %v325
      %v336 = vpop.permute.xlu0 %335
      %339 = vset.pattern.permute.xlu0 0
      %340 = vperm.xlu0 %339, %v326
      %v341 = vpop.permute.xlu0 %340
      %344 = vset.pattern.permute.xlu0 0
      %345 = vperm.xlu0 %344, %v327
      %v346 = vpop.permute.xlu0 %345
      %v349 = vcombine.high %v319, %v319
      %vm350 = vcmask 23552
      %v352 = vsel %vm350, %v320, 0
      %v355 = vsel %vm350, %v321, 0
      %v358 = vsel %vm350, %v322, 0
      %v361 = vsel %vm350, %v323, 0
      %vm363 = vcmask 1042432
      %v364 = vsel %vm363, %v319, 0
      %v366 = vsel %vm363, %v349, 0
      %368 = vmatprep.subr.mxu0 %v366
      %369 = vmatpush1.msra.mxu0 %v364
      %370 = vmatprep.subr.mxu0 0.0
      %371 = vmatpush1.msra.mxu0 0.0
      %372 = vmatprep.subr.mxu0 0.0
      %373 = vmatpush1.msra.mxu0 0.0
      %374 = vmatprep.subr.mxu0 0.0
      %375 = vmatpush1.msra.mxu0 0.0
      %376 = vmatprep.subr.mxu0 0.0
      %377 = vmatpush1.msra.mxu0 0.0
      %378 = vmatprep.subr.mxu0 0.0
      %379 = vmatpush1.msra.mxu0 0.0
      %380 = vmatprep.subr.mxu0 0.0
      %381 = vmatpush1.msra.mxu0 0.0
      %382 = vmatprep.subr.mxu0 0.0
      %383 = vmatpush1.msra.mxu0 0.0
      %384 = vmatprep.subr.mxu0 0.0
      %385 = vmatpush1.msra.mxu0 0.0
      %386 = vmatprep.subr.mxu0 0.0
      %387 = vmatpush1.msra.mxu0 0.0
      %388 = vmatprep.subr.mxu0 0.0
      %389 = vmatpush1.msra.mxu0 0.0
      %390 = vmatprep.subr.mxu0 0.0
      %391 = vmatpush1.msra.mxu0 0.0
      %392 = vmatprep.subr.mxu0 0.0
      %393 = vmatpush1.msra.mxu0 0.0
      %394 = vmatprep.subr.mxu0 0.0
      %395 = vmatpush1.msra.mxu0 0.0
      %396 = vmatprep.subr.mxu0 0.0
      %397 = vmatpush1.msra.mxu0 0.0
      %398 = vmatprep.subr.mxu0 0.0
      %399 = vmatpush1.msra.mxu0 0.0
      %400 = vmatprep.subr.mxu0 0.0
      %401 = vmatpush1.msra.mxu0 0.0
      %402 = vmatprep.subr.mxu0 0.0
      %403 = vmatpush1.msra.mxu0 0.0
      %404 = vmatprep.subr.mxu0 0.0
      %405 = vmatpush1.msra.mxu0 0.0
      %406 = vmatprep.subr.mxu0 0.0
      %407 = vmatpush1.msra.mxu0 0.0
      %408 = vmatprep.subr.mxu0 0.0
      %409 = vmatpush1.msra.mxu0 0.0
      %410 = vmatprep.subr.mxu0 0.0
      %411 = vmatpush1.msra.mxu0 0.0
      %412 = vmatprep.subr.mxu0 0.0
      %413 = vmatpush1.msra.mxu0 0.0
      %414 = vmatprep.subr.mxu0 0.0
      %415 = vmatpush1.msra.mxu0 0.0
      %416 = vmatprep.subr.mxu0 0.0
      %417 = vmatpush1.msra.mxu0 0.0
      %418 = vmatprep.subr.mxu0 0.0
      %419 = vmatpush1.msra.mxu0 0.0
      %420 = vmatprep.subr.mxu0 0.0
      %421 = vmatpush1.msra.mxu0 0.0
      %422 = vmatprep.subr.mxu0 0.0
      %423 = vmatpush1.msra.mxu0 0.0
      %424 = vmatprep.subr.mxu0 0.0
      %425 = vmatpush1.msra.mxu0 0.0
      %426 = vmatprep.subr.mxu0 0.0
      %427 = vmatpush1.msra.mxu0 0.0
      %428 = vmatprep.subr.mxu0 0.0
      %429 = vmatpush1.msra.mxu0 0.0
      %430 = vmatprep.subr.mxu0 0.0
      %431 = vmatpush1.msra.mxu0 0.0
      %432 = vmatprep.mubr.f32.mxu0 0.0
      %433 = vmatmul.mubr.f32.gmra.mrb[0].mxu0 %v352
      %v434 = vpop.f32.mrb[0].mxu0
      %v435 = vadd.f32 %v331, %v434
      %v436 = vpop.f32.mrb[0].mxu0
      %v437 = vadd.f32 %v331, %v436
      %438 = vmatprep.mubr.f32.mxu0 0.0
      %439 = vmatmul.mubr.f32.gmra.mrb[0].mxu0 %v355
      %v440 = vpop.f32.mrb[0].mxu0
      %v441 = vadd.f32 %v336, %v440
      %v442 = vpop.f32.mrb[0].mxu0
      %v443 = vadd.f32 %v336, %v442
      %444 = vmatprep.mubr.f32.mxu0 0.0
      %445 = vmatmul.mubr.f32.gmra.mrb[0].mxu0 %v358
      %v446 = vpop.f32.mrb[0].mxu0
      %v447 = vadd.f32 %v341, %v446
      %v448 = vpop.f32.mrb[0].mxu0
      %v449 = vadd.f32 %v341, %v448
      %450 = vmatprep.mubr.f32.mxu0 0.0
      %451 = vmatmul.mubr.f32.gmra.mrb[0].mxu0 %v361
      %v452 = vpop.f32.mrb[0].mxu0
      %v453 = vadd.f32 %v346, %v452
      %v454 = vpop.f32.mrb[0].mxu0
      %v455 = vadd.f32 %v346, %v454
      %456 = vdwg.mxu0
      %v457 = vmax.f32 %v435, 0.0
      %v458 = vmax.f32 %v437, 0.0
      %v459 = vmax.f32 %v441, 0.0
      %v460 = vmax.f32 %v443, 0.0
      %v461 = vmax.f32 %v447, 0.0
      %v462 = vmax.f32 %v449, 0.0
      %v463 = vmax.f32 %v453, 0.0
      %v464 = vmax.f32 %v455, 0.0
      %v465 = vpack.c.bf16 %v459, %v457
      %v466 = vpack.c.bf16 %v460, %v458
      %v467 = vpack.c.bf16 %v463, %v461
      %v468 = vpack.c.bf16 %v464, %v462
      %v469 = vld [vmem:[%s3] sm:$0xf]
      %v470 = vld [vmem:[%s3 + $0x4] sm:$0xf]
      %v471 = vld [vmem:[%s3 + $0x8] sm:$0xf]
      %v472 = vld [vmem:[%s3 + $0xc] sm:$0xf]
      %v473 = vld [vmem:[%s3 + $0x10] sm:$0xf]
      %v474 = vld [vmem:[%s3 + $0x14] sm:$0xf]
      %v475 = vld [vmem:[%s3 + $0x18] sm:$0xf]
      %v476 = vld [vmem:[%s3 + $0x1c] sm:$0xf]
      %v477 = vld [vmem:[%s4] sm:$0xff]
      %v478 = vld [vmem:[%s4 + $0x8] sm:$0xff]
      %v479 = vld [vmem:[%s4 + $0x10] sm:$0xff]
      %v480 = vld [vmem:[%s4 + $0x18] sm:$0xff]
      %v481 = vld [vmem:[%s4 + $0x20] sm:$0xff]
      %v482 = vld [vmem:[%s4 + $0x28] sm:$0xff]
      %v483 = vld [vmem:[%s4 + $0x30] sm:$0xff]
      %v484 = vld [vmem:[%s4 + $0x38] sm:$0xff]
      %486 = vset.pattern.permute.xlu0 0
      %487 = vperm.xlu0 %486, %v477
      %v488 = vpop.permute.xlu0 %487
      %491 = vset.pattern.permute.xlu0 0
      %492 = vperm.xlu0 %491, %v478
      %v493 = vpop.permute.xlu0 %492
      %496 = vset.pattern.permute.xlu0 0
      %497 = vperm.xlu0 %496, %v479
      %v498 = vpop.permute.xlu0 %497
      %501 = vset.pattern.permute.xlu0 0
      %502 = vperm.xlu0 %501, %v480
      %v503 = vpop.permute.xlu0 %502
      %506 = vset.pattern.permute.xlu0 0
      %507 = vperm.xlu0 %506, %v481
      %v508 = vpop.permute.xlu0 %507
      %511 = vset.pattern.permute.xlu0 0
      %512 = vperm.xlu0 %511, %v482
      %v513 = vpop.permute.xlu0 %512
      %516 = vset.pattern.permute.xlu0 0
      %517 = vperm.xlu0 %516, %v483
      %v518 = vpop.permute.xlu0 %517
      %521 = vset.pattern.permute.xlu0 0
      %522 = vperm.xlu0 %521, %v484
      %v523 = vpop.permute.xlu0 %522
      %v533 = vunpack.c.l.b16 %v469
      %v534 = vunpack.c.l.b16 %v470
      %v535 = vunpack.c.l.b16 %v471
      %v536 = vunpack.c.l.b16 %v472
      %v537 = vunpack.c.l.b16 %v473
      %v538 = vunpack.c.l.b16 %v474
      %v539 = vunpack.c.l.b16 %v475
      %v540 = vunpack.c.l.b16 %v476
      %v541 = vpack.c.b16 %v534, %v533
      %v542 = vpack.c.b16 %v536, %v535
      %v543 = vpack.c.b16 %v538, %v537
      %v544 = vpack.c.b16 %v540, %v539
      %vm545 = vcmask 261120
      %v547 = vsel %vm545, %v541, 0
      %v550 = vsel %vm545, %v542, 0
      %v553 = vsel %vm545, %v543, 0
      %v556 = vsel %vm545, %v544, 0
      %558 = vmatprep.subr.bf16.mxu0 %v466
      %559 = vmatpush1.bf16.msra.mxu0 %v465
      %560 = vmatprep.subr.bf16.mxu0 %v468
      %561 = vmatpush1.bf16.msra.mxu0 %v467
      %562 = vmatprep.subr.bf16.mxu0 0
      %563 = vmatpush1.bf16.msra.mxu0 0
      %564 = vmatprep.subr.bf16.mxu0 0
      %565 = vmatpush1.bf16.msra.mxu0 0
      %566 = vmatprep.subr.bf16.mxu0 0
      %567 = vmatpush1.bf16.msra.mxu0 0
      %568 = vmatprep.subr.bf16.mxu0 0
      %569 = vmatpush1.bf16.msra.mxu0 0
      %570 = vmatprep.subr.bf16.mxu0 0
      %571 = vmatpush1.bf16.msra.mxu0 0
      %572 = vmatprep.subr.bf16.mxu0 0
      %573 = vmatpush1.bf16.msra.mxu0 0
      %574 = vmatprep.subr.bf16.mxu0 0
      %575 = vmatpush1.bf16.msra.mxu0 0
      %576 = vmatprep.subr.bf16.mxu0 0
      %577 = vmatpush1.bf16.msra.mxu0 0
      %578 = vmatprep.subr.bf16.mxu0 0
      %579 = vmatpush1.bf16.msra.mxu0 0
      %580 = vmatprep.subr.bf16.mxu0 0
      %581 = vmatpush1.bf16.msra.mxu0 0
      %582 = vmatprep.subr.bf16.mxu0 0
      %583 = vmatpush1.bf16.msra.mxu0 0
      %584 = vmatprep.subr.bf16.mxu0 0
      %585 = vmatpush1.bf16.msra.mxu0 0
      %586 = vmatprep.subr.bf16.mxu0 0
      %587 = vmatpush1.bf16.msra.mxu0 0
      %588 = vmatprep.subr.bf16.mxu0 0
      %589 = vmatpush1.bf16.msra.mxu0 0
      %590 = vmatprep.mubr.bf16.mxu0 0
      %591 = vmatmul.mubr.bf16.gmra.mrb[0].mxu0 %v547
      %v592 = vpop.f32.mrb[0].mxu0
      %v593 = vadd.f32 %v488, %v592
      %v594 = vpop.f32.mrb[0].mxu0
      %v595 = vadd.f32 %v488, %v594
      %v596 = vpop.f32.mrb[0].mxu0
      %v597 = vadd.f32 %v493, %v596
      %v598 = vpop.f32.mrb[0].mxu0
      %v599 = vadd.f32 %v493, %v598
      %600 = vmatprep.mubr.bf16.mxu0 0
      %601 = vmatmul.mubr.bf16.gmra.mrb[0].mxu0 %v550
      %v602 = vpop.f32.mrb[0].mxu0
      %v603 = vadd.f32 %v498, %v602
      %v604 = vpop.f32.mrb[0].mxu0
      %v605 = vadd.f32 %v498, %v604
      %v606 = vpop.f32.mrb[0].mxu0
      %v607 = vadd.f32 %v503, %v606
      %v608 = vpop.f32.mrb[0].mxu0
      %v609 = vadd.f32 %v503, %v608
      %610 = vmatprep.mubr.bf16.mxu0 0
      %611 = vmatmul.mubr.bf16.gmra.mrb[0].mxu0 %v553
      %v612 = vpop.f32.mrb[0].mxu0
      %v613 = vadd.f32 %v508, %v612
      %v614 = vpop.f32.mrb[0].mxu0
      %v615 = vadd.f32 %v508, %v614
      %v616 = vpop.f32.mrb[0].mxu0
      %v617 = vadd.f32 %v513, %v616
      %v618 = vpop.f32.mrb[0].mxu0
      %v619 = vadd.f32 %v513, %v618
      %620 = vmatprep.mubr.bf16.mxu0 0
      %621 = vmatmul.mubr.bf16.gmra.mrb[0].mxu0 %v556
      %v622 = vpop.f32.mrb[0].mxu0
      %v623 = vadd.f32 %v518, %v622
      %v624 = vpop.f32.mrb[0].mxu0
      %v625 = vadd.f32 %v518, %v624
      %v626 = vpop.f32.mrb[0].mxu0
      %v627 = vadd.f32 %v523, %v626
      %v628 = vpop.f32.mrb[0].mxu0
      %v629 = vadd.f32 %v523, %v628
      %630 = vdwg.mxu0
      %v631 = vmax.f32 %v593, 0.0
      %v632 = vmax.f32 %v595, 0.0
      %v633 = vmax.f32 %v597, 0.0
      %v634 = vmax.f32 %v599, 0.0
      %v635 = vmax.f32 %v603, 0.0
      %v636 = vmax.f32 %v605, 0.0
      %v637 = vmax.f32 %v607, 0.0
      %v638 = vmax.f32 %v609, 0.0
      %v639 = vmax.f32 %v613, 0.0
      %v640 = vmax.f32 %v615, 0.0
      %v641 = vmax.f32 %v617, 0.0
      %v642 = vmax.f32 %v619, 0.0
      %v643 = vmax.f32 %v623, 0.0
      %v644 = vmax.f32 %v625, 0.0
      %v645 = vmax.f32 %v627, 0.0
      %v646 = vmax.f32 %v629, 0.0
      %v647 = vpack.c.bf16 %v633, %v631
      %v648 = vpack.c.bf16 %v634, %v632
      %v649 = vpack.c.bf16 %v637, %v635
      %v650 = vpack.c.bf16 %v638, %v636
      %v651 = vpack.c.bf16 %v641, %v639
      %v652 = vpack.c.bf16 %v642, %v640
      %v653 = vpack.c.bf16 %v645, %v643
      %v654 = vpack.c.bf16 %v646, %v644
      %v655 = vld [vmem:[%s5] sm:$0x1]
      %v656 = vld [vmem:[#allocation2] sm:$0x1]
      %658 = vset.pattern.permute.xlu0 0
      %659 = vperm.xlu0 %658, %v656
      %v660 = vpop.permute.xlu0 %659
      %v662 = vlaneseq
      %v663 = vshrl.u32 %v662, 7
      %v664 = vsub.s32 0, %v663
      %v665 = vrot.slane %v660, %v664
      %vm666 = vcmask 523264
      %v668 = vsel %vm666, %v655, 0
      %670 = vmatprep.subr.bf16.mxu0 %v648
      %671 = vmatpush1.bf16.msra.mxu0 %v647
      %672 = vmatprep.subr.bf16.mxu0 %v650
      %673 = vmatpush1.bf16.msra.mxu0 %v649
      %674 = vmatprep.subr.bf16.mxu0 %v652
      %675 = vmatpush1.bf16.msra.mxu0 %v651
      %676 = vmatprep.subr.bf16.mxu0 %v654
      %677 = vmatpush1.bf16.msra.mxu0 %v653
      %678 = vmatprep.subr.bf16.mxu0 0
      %679 = vmatpush1.bf16.msra.mxu0 0
      %680 = vmatprep.subr.bf16.mxu0 0
      %681 = vmatpush1.bf16.msra.mxu0 0
      %682 = vmatprep.subr.bf16.mxu0 0
      %683 = vmatpush1.bf16.msra.mxu0 0
      %684 = vmatprep.subr.bf16.mxu0 0
      %685 = vmatpush1.bf16.msra.mxu0 0
      %686 = vmatprep.subr.bf16.mxu0 0
      %687 = vmatpush1.bf16.msra.mxu0 0
      %688 = vmatprep.subr.bf16.mxu0 0
      %689 = vmatpush1.bf16.msra.mxu0 0
      %690 = vmatprep.subr.bf16.mxu0 0
      %691 = vmatpush1.bf16.msra.mxu0 0
      %692 = vmatprep.subr.bf16.mxu0 0
      %693 = vmatpush1.bf16.msra.mxu0 0
      %694 = vmatprep.subr.bf16.mxu0 0
      %695 = vmatpush1.bf16.msra.mxu0 0
      %696 = vmatprep.subr.bf16.mxu0 0
      %697 = vmatpush1.bf16.msra.mxu0 0
      %698 = vmatprep.subr.bf16.mxu0 0
      %699 = vmatpush1.bf16.msra.mxu0 0
      %700 = vmatprep.subr.bf16.mxu0 0
      %701 = vmatpush1.bf16.msra.mxu0 0
      %702 = vmatprep.mubr.bf16.mxu0 0
      %703 = vmatmul.mubr.bf16.gmra.mrb[0].mxu0 %v668
      %v704 = vpop.f32.mrb[0].mxu0
      %v705 = vadd.f32 %v665, %v704
      %v706 = vpop.f32.mrb[0].mxu0
      %v707 = vadd.f32 %v665, %v706
      %v708 = vpop.f32.mrb[0].mxu0
      %v709 = vpop.f32.mrb[0].mxu0
      %710 = vdwg.mxu0
      %v711 = vmax.f32 %v705, 0.0
      %v712 = vmax.f32 %v707, 0.0
      %v715 = vcombine.low %v711, %v712
      %v717 = vunpack.c.l.s4 1966171168
      %v718 = vunpack.c.0.s8 %v717
      %v719 = vlaneseq
      %v720 = vshrl.u32 %v719, 7
      %v721 = vsub.s32 %v718, %v720
      %v722 = vrot.slane %v715, %v721
      %v724 = vunpack.c.l.s4 1966171168
      %v725 = vunpack.c.0.s8 %v724
      %v726 = vlaneseq
      %v727 = vshrl.u32 %v726, 7
      %v728 = vsub.s32 %v725, %v727
      %v729 = vrot.slane %v722, %v728
      %v731 = vlaneseq
      %vm732 = vcmp.ge.s32.totalorder %v731, 0
      %vm733 = vcmp.lt.s32.totalorder %v731, 256
      %vm734 = vmand %vm732, %vm733
      %735 = vst.msk [vmem:[%s316] sm:$0x3] %vm734, %v729
      %s736 = smul.u32 2, %s25
      %p737 = scmp.lt.s32.totalorder %s24, 1
      %s738 = scalar_select %p737, %s24, 1
      %p739 = scmp.lt.s32.totalorder %s736, 1
      %s740 = scalar_select %p739, %s736, 1
      %s741 = smul.addr %s738, 2
      %s742 = sadd.s32 %s740, %s741
      %s743 = scalar_lea.vmem %s7, %s742
      // Predicated region
      $region49: #{vt_basic_encoder_forward.1} parent=47 // pred_check
        %p744 = pneg %p206
      $region50: #{vt_basic_encoder_forward.1} parent=47 // pred_check_branch
        %746 = sbr.rel (%p744) target = $region52
      $region51: #{vt_basic_encoder_forward.1} parent=47 // pred_region
        %s747 = smul.u32 2, %s25
      $region52: #{vt_basic_encoder_forward.1} parent=47 // pred_fallthru
        _
    $region48: #{vt_basic_encoder_forward.1} parent=5 // pred_fallthru
      _
    %p748 = scmp.le.s32.totalorder 2, %s15
    // Predicated region
    $region53: #{vt_basic_encoder_forward.1} parent=5 // pred_check
      %p749 = pneg %p748
    $region54: #{vt_basic_encoder_forward.1} parent=5 // pred_check_branch
      %751 = sbr.rel (%p749) target = $region56
    $region55: #{vt_basic_encoder_forward.1} parent=5 // pred_region
      %s752 = ssub.s32 %s15, 2
      // Predicated region
      $region57: #{vt_basic_encoder_forward.1} parent=55 // pred_check
        %p753 = pneg %p212
      $region58: #{vt_basic_encoder_forward.1} parent=55 // pred_check_branch
        %755 = sbr.rel (%p753) target = $region60
      $region59: #{vt_basic_encoder_forward.1} parent=55 // pred_region
        %s756 = smul.u32 2, %s27
        %p757 = scmp.lt.s32.totalorder %s26, 1
        %s758 = scalar_select %p757, %s26, 1
        %p759 = scmp.lt.s32.totalorder %s756, 1
        %s760 = scalar_select %p759, %s756, 1
        %s761 = smul.addr %s758, 2
        %s762 = sadd.s32 %s760, %s761
        %s763 = scalar_lea.vmem %s7, %s762
      $region60: #{vt_basic_encoder_forward.1} parent=55 // pred_fallthru
        _
    $region56: #{vt_basic_encoder_forward.1} parent=5 // pred_fallthru
      _
  $region6: #{vt_basic_encoder_forward.1} parent=0 // loop_footer
    %s19 = sadd.s32 1, %s15
  $region7: #{vt_basic_encoder_forward.1} parent=0 // loop_footer_branch
    %14 = sbr.rel target = $region3
  $region8: #{vt_basic_encoder_forward.1} parent=0 // loop_exit
    _

</llo_original>
